<compile_context>
chip_gen: v5e
topology: v5e:2x2
jax: 0.10.0
libtpu: 0.0.40
codegen_flags: <defaults>
</compile_context>

<pallas_src>
import functools
import math

import jax
import jax.numpy as jnp
from jax.experimental import pallas as pl

D_MODEL = 32
NHEAD = 4
NUM_LAYERS = 2
# TODO(synk): PositionwiseFeedForward's hidden width is not exposed by Decoder_p's
# signature; assume the standard 4*d_model.
D_FF = 4 * D_MODEL
D_HEAD = D_MODEL // NHEAD
LN_EPS = 1e-5                 # PyTorch nn.LayerNorm default
SLAB_W = 128                  # lane width of the packed parameter/constant slab


def _round8(v):
    return (v + 7) // 8 * 8


# ----------------------------------------------------------------------------- glue (plain JAX)
def positional_encoding(batch, length, d_model, obs_time):
    """Observation-time positional encoding (TransformerJM style)."""
    position = obs_time.astype(jnp.float32)[..., None]                      # (B, L, 1)
    div_term = jnp.exp(jnp.arange(0, d_model, 2, dtype=jnp.float32)
                       * (-math.log(10000.0) / d_model))                    # (D/2,)
    pe = jnp.zeros((batch, length, d_model), jnp.float32)
    pe = pe.at[:, :, 0::2].set(jnp.sin(position * div_term))
    pe = pe.at[:, :, 1::2].set(jnp.cos(position * div_term))
    return pe


def _layer_norm(x, gamma, beta):
    mu = jnp.mean(x, axis=-1, keepdims=True)
    var = jnp.mean((x - mu) ** 2, axis=-1, keepdims=True)
    return (x - mu) * jax.lax.rsqrt(var + LN_EPS) * gamma + beta


# ----------------------------------------------------------------------------- Pallas kernel
def _decoder_kernel(data_ref, w_ref, out_ref, *, nq, hnk, d, d_ff, lhs_w,
                    r_wo, r_w1, r_w2, r_vec, r_hmask, r_seg):
    two_d = 2 * d
    n_lhs = nq + hnk

    lhs = data_ref[0:n_lhs, :]                       # (NQ+H*NK, lhs_w) block-diag [x|kv_rep|1s]
    x = lhs[0:nq, 0:d]                               # (NQ, D)  q + positional encoding
    bias = data_ref[n_lhs:n_lhs + nq, 0:hnk]         # (NQ, H*NK) per-head-tiled additive mask

    # One MXU pass: scaled+biased Q projection AND head-replicated K|V projections
    # (biases folded into the matmul via the ones columns of the block-diagonal LHS).
    proj = jnp.dot(lhs, w_ref[0:lhs_w, 0:two_d], preferred_element_type=jnp.float32)
    qfull = proj[0:nq, :]                                               # (NQ, 2D) = [0 | q_p]
    kvm = proj[nq:n_lhs, :] * w_ref[r_hmask:r_hmask + hnk, 0:two_d]     # (H*NK,2D)=[V_blk|K_blk]

    # All heads' scores in one matmul: qfull's V half is exactly zero, so the 2D-wide
    # contraction equals the per-head D_HEAD-wide dot products against K_blk.
    s = jax.lax.dot_general(qfull, kvm, (((1,), (1,)), ((), ())),
                            preferred_element_type=jnp.float32) + bias  # (NQ, H*NK)
    s = s - jnp.max(s, axis=-1, keepdims=True)       # one global row-max is valid per head
    p = jnp.exp(s)
    # Per-head softmax denominators via a 0/1 segment-sum matmul (MXU, not 4 XLU reduces),
    # emitted directly broadcast over each head's output columns.
    denom = jnp.dot(p, w_ref[r_seg:r_seg + hnk, 0:d], preferred_element_type=jnp.float32)
    pv = jnp.dot(p, kvm, preferred_element_type=jnp.float32)            # V half = unnorm. attn
    attn = pv[:, 0:d] * pl.reciprocal(denom, approx=True)               # (NQ, D)

    # Output projection -> residual -> LayerNorm -> FFN(ReLU) -> residual -> LayerNorm.
    # (dropout == identity in eval mode)
    attn = (jnp.dot(attn, w_ref[r_wo:r_wo + d, 0:d], preferred_element_type=jnp.float32)
            + w_ref[r_vec + 0:r_vec + 1, 0:d])
    y = _layer_norm(x + attn, w_ref[r_vec + 3:r_vec + 4, 0:d],
                    w_ref[r_vec + 4:r_vec + 5, 0:d])
    hid = jnp.maximum(
        jnp.dot(y, w_ref[r_w1:r_w1 + d, 0:d_ff], preferred_element_type=jnp.float32)
        + w_ref[r_vec + 1:r_vec + 2, 0:d_ff], 0.0)
    ff = (jnp.dot(hid, w_ref[r_w2:r_w2 + d_ff, 0:d], preferred_element_type=jnp.float32)
          + w_ref[r_vec + 2:r_vec + 3, 0:d])
    out_ref[...] = _layer_norm(y + ff, w_ref[r_vec + 5:r_vec + 6, 0:d],
                               w_ref[r_vec + 6:r_vec + 7, 0:d])


# ----------------------------------------------------------------------------- wrapper
@jax.jit
def decoder_p_forward(q, kv, mask, pred_time, params):
    B, Lq, D = q.shape
    Lk = kv.shape[1]
    H, DH, F = NHEAD, D_HEAD, D_FF
    NQ, NK, HNK = B * Lq, B * Lk, NHEAD * B * Lk
    scale = 1.0 / math.sqrt(DH)
    lhs_w = _round8(2 * D + 2)            # block-diag LHS width (x cols | kv cols | 2 ones cols)

    # Only the LAST decoder layer's output survives the reference loop (every layer
    # consumes the same `q`), so only the last layer's parameters are packed / computed.
    last = NUM_LAYERS - 1
    p_ = {k: v[last] for k, v in params.items()}

    # ---------------- data slab: block-diagonal LHS + per-head-tiled additive bias ----------------
    x = (q + positional_encoding(B, Lq, D, pred_time)).reshape(NQ, D)
    kvf = kv.reshape(NK, D)
    lhs = jnp.zeros((NQ + HNK, lhs_w), jnp.float32)
    lhs = lhs.at[0:NQ, 0:D].set(x)                               # q rows: x in cols 0..D-1
    lhs = lhs.at[0:NQ, 2 * D].set(1.0)                           # q ones column
    lhs = lhs.at[NQ:, D:2 * D].set(jnp.tile(kvf, (H, 1)))        # row NQ + h*NK + j = kv[j]
    lhs = lhs.at[NQ:, 2 * D + 1].set(1.0)                        # kv ones column

    bq_id = jnp.arange(B)[:, None, None, None]                   # query-batch id
    bk_id = jnp.arange(B)[None, None, :, None]                   # key-batch id
    keep = (mask != 0.0)[:, :, None, :]                          # (B, Lq, 1, Lk)
    bias = jnp.where(bq_id == bk_id, jnp.where(keep, 0.0, -1e9), -2e9)   # (B, Lq, B, Lk)
    bias = bias.reshape(NQ, NK).astype(jnp.float32)
    bias_blk = jnp.tile(bias, (1, H))                            # (NQ, H*NK): same mask per head

    data = jnp.zeros((NQ + HNK + NQ, lhs_w), jnp.float32)
    data = data.at[0:NQ + HNK, :].set(lhs)
    data = data.at[NQ + HNK:, 0:HNK].set(bias_blk)

    # ---------------- parameter / constant slab (one lane-dense input) ----------------
    r_wo = lhs_w                       # 72
    r_w1 = r_wo + D                    # 104
    r_w2 = r_w1 + D                    # 136
    r_vec = r_w2 + F                   # 264   (7 packed bias/LayerNorm rows)
    r_hmask = _round8(r_vec + 7)       # 272
    r_seg = r_hmask + HNK              # 336
    n_rows = r_seg + HNK               # 400

    # Projection RHS: q rows emit [0 | x@wq*scale + bq*scale], kv rows emit [v_p | k_p].
    wproj = jnp.zeros((lhs_w, 2 * D), jnp.float32)
    wproj = wproj.at[0:D, D:2 * D].set(p_["wq"] * scale)
    wproj = wproj.at[D:2 * D, 0:D].set(p_["wv"])
    wproj = wproj.at[D:2 * D, D:2 * D].set(p_["wk"])
    wproj = wproj.at[2 * D, D:2 * D].set(p_["bq"] * scale)
    wproj = wproj.at[2 * D + 1, 0:D].set(p_["bv"])
    wproj = wproj.at[2 * D + 1, D:2 * D].set(p_["bk"])

    # Hoisted compile-time 0/1 constants: per-head block mask for [V_blk|K_blk] and the
    # segment-sum matrix producing per-head softmax denominators broadcast over D columns.
    h_of_row = jnp.arange(HNK) // NK
    hmask2 = (h_of_row[:, None] == (jnp.arange(2 * D) % D) // DH).astype(jnp.float32)
    seg2 = (h_of_row[:, None] == jnp.arange(D) // DH).astype(jnp.float32)

    wslab = jnp.zeros((n_rows, SLAB_W), jnp.float32)
    wslab = wslab.at[0:lhs_w, 0:2 * D].set(wproj)
    wslab = wslab.at[r_wo:r_wo + D, 0:D].set(p_["wo"])
    wslab = wslab.at[r_w1:r_w1 + D, 0:F].set(p_["w1"])
    wslab = wslab.at[r_w2:r_w2 + F, 0:D].set(p_["w2"])
    wslab = wslab.at[r_vec + 0, 0:D].set(p_["bo"])
    wslab = wslab.at[r_vec + 1, 0:F].set(p_["b1"])
    wslab = wslab.at[r_vec + 2, 0:D].set(p_["b2"])
    wslab = wslab.at[r_vec + 3, 0:D].set(p_["g1"])
    wslab = wslab.at[r_vec + 4, 0:D].set(p_["be1"])
    wslab = wslab.at[r_vec + 5, 0:D].set(p_["g2"])
    wslab = wslab.at[r_vec + 6, 0:D].set(p_["be2"])
    wslab = wslab.at[r_hmask:r_hmask + HNK, 0:2 * D].set(hmask2)
    wslab = wslab.at[r_seg:r_seg + HNK, 0:D].set(seg2)

    kernel = functools.partial(
        _decoder_kernel, nq=NQ, hnk=HNK, d=D, d_ff=F, lhs_w=lhs_w,
        r_wo=r_wo, r_w1=r_w1, r_w2=r_w2, r_vec=r_vec, r_hmask=r_hmask, r_seg=r_seg)
    out = pl.pallas_call(
        kernel,
        # No grid: the whole (tiny) problem is one kernel invocation; both operands are
        # single full-array VMEM blocks (~0.25 MiB total).
        out_shape=jax.ShapeDtypeStruct((NQ, D), jnp.float32),
    )(data, wslab)
    return out.reshape(B, Lq, D)


# ----------------------------------------------------------------------------- pure-JAX reference
def decoder_p_reference(q, kv, mask, pred_time, params):
    B, Lq, D = q.shape
    Lk = kv.shape[1]
    qp = q + positional_encoding(B, Lq, D, pred_time)
    scale = 1.0 / math.sqrt(D_HEAD)
    x = qp
    for l in range(NUM_LAYERS):
        Q = qp @ params["wq"][l] + params["bq"][l]
        K = kv @ params["wk"][l] + params["bk"][l]
        V = kv @ params["wv"][l] + params["bv"][l]
        Qh = Q.reshape(B, Lq, NHEAD, D_HEAD).transpose(0, 2, 1, 3)
        Kh = K.reshape(B, Lk, NHEAD, D_HEAD).transpose(0, 2, 1, 3)
        Vh = V.reshape(B, Lk, NHEAD, D_HEAD).transpose(0, 2, 1, 3)
        s = jnp.einsum("bhqd,bhkd->bhqk", Qh, Kh) * scale
        s = jnp.where(mask[:, None] == 0.0, -1e9, s)
        p = jax.nn.softmax(s, axis=-1)
        o = jnp.einsum("bhqk,bhkd->bhqd", p, Vh).transpose(0, 2, 1, 3).reshape(B, Lq, D)
        attn = o @ params["wo"][l] + params["bo"][l]
        y = _layer_norm(qp + attn, params["g1"][l], params["be1"][l])
        ff = (jnp.maximum(y @ params["w1"][l] + params["b1"][l], 0.0)
              @ params["w2"][l] + params["b2"][l])
        x = _layer_norm(y + ff, params["g2"][l], params["be2"][l])
    return x


# ----------------------------------------------------------------------------- parameter init
def init_params(key):
    L, D, F = NUM_LAYERS, D_MODEL, D_FF
    keys = jax.random.split(key, 12)
    nrm = lambda k, shape, s: s * jax.random.normal(k, shape, jnp.float32)
    params = {
        # Linear weights stored as (in, out), i.e. PyTorch weight.T (parameter-setup glue).
        "wq": nrm(keys[0], (L, D, D), 0.1), "wk": nrm(keys[1], (L, D, D), 0.1),
        "wv": nrm(keys[2], (L, D, D), 0.1), "wo": nrm(keys[3], (L, D, D), 0.1),
        "bq": nrm(keys[4], (L, D), 0.02), "bk": nrm(keys[5], (L, D), 0.02),
        "bv": nrm(keys[6], (L, D), 0.02), "bo": nrm(keys[7], (L, D), 0.02),
        "w1": nrm(keys[8], (L, D, F), 0.1), "b1": nrm(keys[9], (L, F), 0.02),
        "w2": nrm(keys[10], (L, F, D), 0.1), "b2": nrm(keys[11], (L, D), 0.02),
        "g1": jnp.ones((L, D), jnp.float32), "be1": jnp.zeros((L, D), jnp.float32),
        "g2": jnp.ones((L, D), jnp.float32), "be2": jnp.zeros((L, D), jnp.float32),
    }
    return params


if __name__ == "__main__":
    key = jax.random.PRNGKey(0)
    kq, kkv, kt, kp = jax.random.split(key, 4)

    B, Lq, Lk = 2, 4, 8
    q = jax.random.normal(kq, (B, Lq, D_MODEL), jnp.float32)
    kv = jax.random.normal(kkv, (B, Lk, D_MODEL), jnp.float32)
    pred_time = jnp.cumsum(jax.random.uniform(kt, (B, Lq), jnp.float32), axis=-1)
    mask = jnp.ones((B, Lq, Lk), jnp.float32).at[1, :, 6:].set(0.0)  # pad last 2 kv of batch 1
    params = init_params(kp)

    out = decoder_p_forward(q, kv, mask, pred_time, params)
    out = jax.block_until_ready(out)

    ref = decoder_p_reference(q, kv, mask, pred_time, params)
    assert out.shape == (B, Lq, D_MODEL)
    err = float(jnp.max(jnp.abs(out - ref)))
    assert err < 5e-2, f"max abs error {err}"
    print("KERNEL_OK")
</pallas_src>

<mosaic_0001>
module attributes {stable_mosaic.version = 11 : i64} {
  func.func @_decoder_kernel(%arg0: memref<80x72xf32, #tpu.memory_space<vmem>>, %arg1: memref<400x128xf32, #tpu.memory_space<vmem>>, %arg2: memref<8x32xf32, #tpu.memory_space<vmem>>) attributes {dimension_semantics = [], scalar_prefetch = 0 : i64, scratch_operands = 0 : i64, tpu.core_type = #tpu.core_type<tc>} {
    %c0 = arith.constant 0 : index
    %c0_0 = arith.constant 0 : index
    %0 = vector.load %arg0[%c0, %c0_0] : memref<80x72xf32, #tpu.memory_space<vmem>>, vector<72x72xf32>
    %1 = vector.extract_strided_slice %0 {offsets = [0, 0], sizes = [8, 32], strides = [1, 1]} : vector<72x72xf32> to vector<8x32xf32>
    %c72 = arith.constant 72 : index
    %c0_1 = arith.constant 0 : index
    %2 = vector.load %arg0[%c72, %c0_1] : memref<80x72xf32, #tpu.memory_space<vmem>>, vector<8x64xf32>
    %c0_2 = arith.constant 0 : index
    %c0_3 = arith.constant 0 : index
    %3 = vector.load %arg1[%c0_2, %c0_3] : memref<400x128xf32, #tpu.memory_space<vmem>>, vector<72x64xf32>
    %cst = arith.constant dense<0.000000e+00> : vector<72x64xf32>
    %4 = tpu.matmul %0, %3, %cst {dimension_numbers = #tpu.dot_dimension_numbers<[1], [0], [0], [1], [0, 0, 1, 1], [], []>} : vector<72x72xf32>, vector<72x64xf32>, vector<72x64xf32> -> vector<72x64xf32>
    %5 = vector.extract_strided_slice %4 {offsets = [0, 0], sizes = [8, 64], strides = [1, 1]} : vector<72x64xf32> to vector<8x64xf32>
    %6 = vector.extract_strided_slice %4 {offsets = [8, 0], sizes = [64, 64], strides = [1, 1]} : vector<72x64xf32> to vector<64x64xf32>
    %c272 = arith.constant 272 : index
    %c0_4 = arith.constant 0 : index
    %7 = vector.load %arg1[%c272, %c0_4] : memref<400x128xf32, #tpu.memory_space<vmem>>, vector<64x64xf32>
    %8 = arith.mulf %6, %7 : vector<64x64xf32>
    %cst_5 = arith.constant dense<0.000000e+00> : vector<8x64xf32>
    %9 = tpu.matmul %5, %8, %cst_5 {dimension_numbers = #tpu.dot_dimension_numbers<[1], [1], [0], [0], [0, 0, 1, 0], [], []>} : vector<8x64xf32>, vector<64x64xf32>, vector<8x64xf32> -> vector<8x64xf32>
    %10 = arith.addf %9, %2 : vector<8x64xf32>
    %cst_6 = arith.constant dense<0xFF800000> : vector<8xf32>
    %11 = vector.multi_reduction <maximumf>, %10, %cst_6 [1] : vector<8x64xf32> to vector<8xf32>
    %12 = vector.shape_cast %11 : vector<8xf32> to vector<8x1xf32>
    %13 = vector.broadcast %12 : vector<8x1xf32> to vector<8x64xf32>
    %14 = arith.subf %10, %13 : vector<8x64xf32>
    %15 = math.exp %14 : vector<8x64xf32>
    %c336 = arith.constant 336 : index
    %c0_7 = arith.constant 0 : index
    %16 = vector.load %arg1[%c336, %c0_7] : memref<400x128xf32, #tpu.memory_space<vmem>>, vector<64x32xf32>
    %cst_8 = arith.constant dense<0.000000e+00> : vector<8x32xf32>
    %17 = tpu.matmul %15, %16, %cst_8 {dimension_numbers = #tpu.dot_dimension_numbers<[1], [0], [0], [1], [0, 0, 1, 1], [], []>} : vector<8x64xf32>, vector<64x32xf32>, vector<8x32xf32> -> vector<8x32xf32>
    %cst_9 = arith.constant dense<0.000000e+00> : vector<8x64xf32>
    %18 = tpu.matmul %15, %8, %cst_9 {dimension_numbers = #tpu.dot_dimension_numbers<[1], [0], [0], [1], [0, 0, 1, 1], [], []>} : vector<8x64xf32>, vector<64x64xf32>, vector<8x64xf32> -> vector<8x64xf32>
    %19 = vector.extract_strided_slice %18 {offsets = [0, 0], sizes = [8, 32], strides = [1, 1]} : vector<8x64xf32> to vector<8x32xf32>
    %20 = tpu.reciprocal %17 {approx = true} : vector<8x32xf32> -> vector<8x32xf32>
    %21 = arith.mulf %19, %20 : vector<8x32xf32>
    %c72_10 = arith.constant 72 : index
    %c0_11 = arith.constant 0 : index
    %22 = vector.load %arg1[%c72_10, %c0_11] : memref<400x128xf32, #tpu.memory_space<vmem>>, vector<32x32xf32>
    %cst_12 = arith.constant dense<0.000000e+00> : vector<8x32xf32>
    %23 = tpu.matmul %21, %22, %cst_12 {dimension_numbers = #tpu.dot_dimension_numbers<[1], [0], [0], [1], [0, 0, 1, 1], [], []>} : vector<8x32xf32>, vector<32x32xf32>, vector<8x32xf32> -> vector<8x32xf32>
    %c264 = arith.constant 264 : index
    %c0_13 = arith.constant 0 : index
    %24 = vector.load %arg1[%c264, %c0_13] : memref<400x128xf32, #tpu.memory_space<vmem>>, vector<1x32xf32>
    %25 = vector.broadcast %24 : vector<1x32xf32> to vector<8x32xf32>
    %26 = arith.addf %23, %25 : vector<8x32xf32>
    %27 = arith.addf %1, %26 : vector<8x32xf32>
    %c267 = arith.constant 267 : index
    %c0_14 = arith.constant 0 : index
    %28 = vector.load %arg1[%c267, %c0_14] : memref<400x128xf32, #tpu.memory_space<vmem>>, vector<1x32xf32>
    %c268 = arith.constant 268 : index
    %c0_15 = arith.constant 0 : index
    %29 = vector.load %arg1[%c268, %c0_15] : memref<400x128xf32, #tpu.memory_space<vmem>>, vector<1x32xf32>
    %cst_16 = arith.constant dense<0.000000e+00> : vector<8xf32>
    %30 = vector.multi_reduction <add>, %27, %cst_16 [1] : vector<8x32xf32> to vector<8xf32>
    %31 = vector.shape_cast %30 : vector<8xf32> to vector<8x1xf32>
    %cst_17 = arith.constant 3.200000e+01 : f32
    %32 = vector.broadcast %cst_17 : f32 to vector<8x1xf32>
    %33 = arith.divf %31, %32 : vector<8x1xf32>
    %34 = vector.broadcast %33 : vector<8x1xf32> to vector<8x32xf32>
    %35 = arith.subf %27, %34 : vector<8x32xf32>
    %36 = arith.mulf %35, %35 : vector<8x32xf32>
    %cst_18 = arith.constant dense<0.000000e+00> : vector<8xf32>
    %37 = vector.multi_reduction <add>, %36, %cst_18 [1] : vector<8x32xf32> to vector<8xf32>
    %38 = vector.shape_cast %37 : vector<8xf32> to vector<8x1xf32>
    %cst_19 = arith.constant 3.200000e+01 : f32
    %39 = vector.broadcast %cst_19 : f32 to vector<8x1xf32>
    %40 = arith.divf %38, %39 : vector<8x1xf32>
    %41 = vector.broadcast %33 : vector<8x1xf32> to vector<8x32xf32>
    %42 = arith.subf %27, %41 : vector<8x32xf32>
    %cst_20 = arith.constant 9.99999974E-6 : f32
    %43 = vector.broadcast %cst_20 : f32 to vector<8x1xf32>
    %44 = arith.addf %40, %43 : vector<8x1xf32>
    %45 = math.rsqrt %44 : vector<8x1xf32>
    %46 = vector.broadcast %45 : vector<8x1xf32> to vector<8x32xf32>
    %47 = arith.mulf %42, %46 : vector<8x32xf32>
    %48 = vector.broadcast %28 : vector<1x32xf32> to vector<8x32xf32>
    %49 = arith.mulf %47, %48 : vector<8x32xf32>
    %50 = vector.broadcast %29 : vector<1x32xf32> to vector<8x32xf32>
    %51 = arith.addf %49, %50 : vector<8x32xf32>
    %c104 = arith.constant 104 : index
    %c0_21 = arith.constant 0 : index
    %52 = vector.load %arg1[%c104, %c0_21] : memref<400x128xf32, #tpu.memory_space<vmem>>, vector<32x128xf32>
    %cst_22 = arith.constant dense<0.000000e+00> : vector<8x128xf32>
    %53 = tpu.matmul %51, %52, %cst_22 {dimension_numbers = #tpu.dot_dimension_numbers<[1], [0], [0], [1], [0, 0, 1, 1], [], []>} : vector<8x32xf32>, vector<32x128xf32>, vector<8x128xf32> -> vector<8x128xf32>
    %c265 = arith.constant 265 : index
    %c0_23 = arith.constant 0 : index
    %54 = vector.load %arg1[%c265, %c0_23] : memref<400x128xf32, #tpu.memory_space<vmem>>, vector<1x128xf32>
    %55 = vector.broadcast %54 : vector<1x128xf32> to vector<8x128xf32>
    %56 = arith.addf %53, %55 : vector<8x128xf32>
    %cst_24 = arith.constant 0.000000e+00 : f32
    %57 = vector.broadcast %cst_24 : f32 to vector<8x128xf32>
    %58 = arith.maximumf %56, %57 : vector<8x128xf32>
    %c136 = arith.constant 136 : index
    %c0_25 = arith.constant 0 : index
    %59 = vector.load %arg1[%c136, %c0_25] : memref<400x128xf32, #tpu.memory_space<vmem>>, vector<128x32xf32>
    %cst_26 = arith.constant dense<0.000000e+00> : vector<8x32xf32>
    %60 = tpu.matmul %58, %59, %cst_26 {dimension_numbers = #tpu.dot_dimension_numbers<[1], [0], [0], [1], [0, 0, 1, 1], [], []>} : vector<8x128xf32>, vector<128x32xf32>, vector<8x32xf32> -> vector<8x32xf32>
    %c266 = arith.constant 266 : index
    %c0_27 = arith.constant 0 : index
    %61 = vector.load %arg1[%c266, %c0_27] : memref<400x128xf32, #tpu.memory_space<vmem>>, vector<1x32xf32>
    %62 = vector.broadcast %61 : vector<1x32xf32> to vector<8x32xf32>
    %63 = arith.addf %60, %62 : vector<8x32xf32>
    %64 = arith.addf %51, %63 : vector<8x32xf32>
    %c269 = arith.constant 269 : index
    %c0_28 = arith.constant 0 : index
    %65 = vector.load %arg1[%c269, %c0_28] : memref<400x128xf32, #tpu.memory_space<vmem>>, vector<1x32xf32>
    %c270 = arith.constant 270 : index
    %c0_29 = arith.constant 0 : index
    %66 = vector.load %arg1[%c270, %c0_29] : memref<400x128xf32, #tpu.memory_space<vmem>>, vector<1x32xf32>
    %cst_30 = arith.constant dense<0.000000e+00> : vector<8xf32>
    %67 = vector.multi_reduction <add>, %64, %cst_30 [1] : vector<8x32xf32> to vector<8xf32>
    %68 = vector.shape_cast %67 : vector<8xf32> to vector<8x1xf32>
    %cst_31 = arith.constant 3.200000e+01 : f32
    %69 = vector.broadcast %cst_31 : f32 to vector<8x1xf32>
    %70 = arith.divf %68, %69 : vector<8x1xf32>
    %71 = vector.broadcast %70 : vector<8x1xf32> to vector<8x32xf32>
    %72 = arith.subf %64, %71 : vector<8x32xf32>
    %73 = arith.mulf %72, %72 : vector<8x32xf32>
    %cst_32 = arith.constant dense<0.000000e+00> : vector<8xf32>
    %74 = vector.multi_reduction <add>, %73, %cst_32 [1] : vector<8x32xf32> to vector<8xf32>
    %75 = vector.shape_cast %74 : vector<8xf32> to vector<8x1xf32>
    %cst_33 = arith.constant 3.200000e+01 : f32
    %76 = vector.broadcast %cst_33 : f32 to vector<8x1xf32>
    %77 = arith.divf %75, %76 : vector<8x1xf32>
    %78 = vector.broadcast %70 : vector<8x1xf32> to vector<8x32xf32>
    %79 = arith.subf %64, %78 : vector<8x32xf32>
    %cst_34 = arith.constant 9.99999974E-6 : f32
    %80 = vector.broadcast %cst_34 : f32 to vector<8x1xf32>
    %81 = arith.addf %77, %80 : vector<8x1xf32>
    %82 = math.rsqrt %81 : vector<8x1xf32>
    %83 = vector.broadcast %82 : vector<8x1xf32> to vector<8x32xf32>
    %84 = arith.mulf %79, %83 : vector<8x32xf32>
    %85 = vector.broadcast %65 : vector<1x32xf32> to vector<8x32xf32>
    %86 = arith.mulf %84, %85 : vector<8x32xf32>
    %87 = vector.broadcast %66 : vector<1x32xf32> to vector<8x32xf32>
    %88 = arith.addf %86, %87 : vector<8x32xf32>
    %c0_35 = arith.constant 0 : index
    %c0_36 = arith.constant 0 : index
    %89 = vector.load %arg2[%c0_35, %c0_36] : memref<8x32xf32, #tpu.memory_space<vmem>>, vector<8x32xf32>
    tpu.vector_store %arg2[%c0_35, %c0_36], %88 {strides = array<i32>} : memref<8x32xf32, #tpu.memory_space<vmem>>, vector<8x32xf32>,
    return
  }
}

</mosaic_0001>

<llo_original>
// kernel: decoder_p_forward.1
$region0: #{decoder_p_forward.1}
  #allocation0 [shape = 'u32[]', space=smem, size = 0x4, offset = 0x4, fixed_abs, tag = 'smem constant byte address 0x4 - core index']
  #allocation1 [shape = 'u32[72,128]{1,0:T(1,128)}', space=vmem, size = 0x9000, scoped, tag = 'internal scratch']
  %s0 = inlined_call_operand.vmem [shape: f32[80,72], index: 0, kind: input, shape index: {}]
  %s1 = inlined_call_operand.vmem [shape: f32[400,128], index: 1, kind: input, shape index: {}]
  %s2 = inlined_call_operand.hbm [shape: f32[8,32], index: 2, kind: output, shape index: {}]
  %s3 = sld [smem:[#allocation0]]
  $region18: #{decoder_p_forward.1} parent=0
    _
  %s5 = ssub.s32 1, %s3
  %s6 = scalar_select 0, %s5, %s3
  $region1: #{decoder_p_forward.1} parent=0
    #allocation2 [shape = 'u8[4096]{0}', space=vmem, size = 0x1000, scoped, tag = 'output window, operand 0, single buffered']
    #allocation3 [shape = 's32[1]{0}', space=sflag, size = 0x4, scoped, tag = 'scoped memory for decoder_p_forward.1']
    %7 = vsyncpa [#allocation3], 0
    // Predicated region
    $region2: #{decoder_p_forward.1} parent=1 // pred_check
      _
    $region3: #{decoder_p_forward.1} parent=1 // pred_check_branch
      %9 = sbr.rel (0) target = $region5
    $region4: #{decoder_p_forward.1} parent=1 // pred_region
      _
    $region5: #{decoder_p_forward.1} parent=1 // pred_fallthru
      _
    // Predicated region
    $region6: #{decoder_p_forward.1} parent=1 // pred_check
      _
    $region7: #{decoder_p_forward.1} parent=1 // pred_check_branch
      %11 = sbr.rel (0) target = $region9
    $region8: #{decoder_p_forward.1} parent=1 // pred_region
      _
    $region9: #{decoder_p_forward.1} parent=1 // pred_fallthru
      _
    %v12 = vld [vmem:[%s0] sm:$0xff]
    %v13 = vld [vmem:[%s0 + $0x8] sm:$0xff]
    %v14 = vld [vmem:[%s0 + $0x10] sm:$0xff]
    %v15 = vld [vmem:[%s0 + $0x18] sm:$0xff]
    %v16 = vld [vmem:[%s0 + $0x20] sm:$0xff]
    %v17 = vld [vmem:[%s0 + $0x28] sm:$0xff]
    %v18 = vld [vmem:[%s0 + $0x30] sm:$0xff]
    %v19 = vld [vmem:[%s0 + $0x38] sm:$0xff]
    %v20 = vld [vmem:[%s0 + $0x40] sm:$0xff]
    %v21 = vld [vmem:[%s0 + $0x48] sm:$0xff]
    %v22 = vld [vmem:[%s1] sm:$0xff]
    %v23 = vld [vmem:[%s1 + $0x8] sm:$0xff]
    %v24 = vld [vmem:[%s1 + $0x10] sm:$0xff]
    %v25 = vld [vmem:[%s1 + $0x18] sm:$0xff]
    %v26 = vld [vmem:[%s1 + $0x20] sm:$0xff]
    %v27 = vld [vmem:[%s1 + $0x28] sm:$0xff]
    %v28 = vld [vmem:[%s1 + $0x30] sm:$0xff]
    %v29 = vld [vmem:[%s1 + $0x38] sm:$0xff]
    %v30 = vld [vmem:[%s1 + $0x40] sm:$0xff]
    %vm31 = vcmask 588800
    %v33 = vsel %vm31, %v12, 0
    %v36 = vsel %vm31, %v13, 0
    %v39 = vsel %vm31, %v14, 0
    %v42 = vsel %vm31, %v15, 0
    %v45 = vsel %vm31, %v16, 0
    %v48 = vsel %vm31, %v17, 0
    %v51 = vsel %vm31, %v18, 0
    %v54 = vsel %vm31, %v19, 0
    %v57 = vsel %vm31, %v20, 0
    %59 = vmatpush.msra.mxu0 0.0
    %60 = vmatpush.msra.mxu0 0.0
    %61 = vmatpush.msra.mxu0 0.0
    %62 = vmatpush.msra.mxu0 0.0
    %63 = vmatpush.msra.mxu0 0.0
    %64 = vmatpush.msra.mxu0 0.0
    %65 = vmatpush.msra.mxu0 0.0
    %66 = vmatpush.msra.mxu0 %v30
    %67 = vmatpush.msra.mxu0 %v29
    %68 = vmatpush.msra.mxu0 %v28
    %69 = vmatpush.msra.mxu0 %v27
    %70 = vmatpush.msra.mxu0 %v26
    %71 = vmatpush.msra.mxu0 %v25
    %72 = vmatpush.msra.mxu0 %v24
    %73 = vmatpush.msra.mxu0 %v23
    %74 = vmatpush.msra.mxu0 %v22
    %75 = vmatmul.f32.gmra.mxu0 %v33
    %v76 = vpop.f32.mrf.mxu0
    %v77 = vadd.f32 0.0, %v76
    %78 = vmatmul.f32.gmra.mxu0 %v36
    %v79 = vpop.f32.mrf.mxu0
    %v80 = vadd.f32 0.0, %v79
    %81 = vmatmul.f32.gmra.mxu0 %v39
    %v82 = vpop.f32.mrf.mxu0
    %v83 = vadd.f32 0.0, %v82
    %84 = vmatmul.f32.gmra.mxu0 %v42
    %v85 = vpop.f32.mrf.mxu0
    %v86 = vadd.f32 0.0, %v85
    %87 = vmatmul.f32.gmra.mxu0 %v45
    %v88 = vpop.f32.mrf.mxu0
    %v89 = vadd.f32 0.0, %v88
    %90 = vmatmul.f32.gmra.mxu0 %v48
    %v91 = vpop.f32.mrf.mxu0
    %v92 = vadd.f32 0.0, %v91
    %93 = vmatmul.f32.gmra.mxu0 %v51
    %v94 = vpop.f32.mrf.mxu0
    %v95 = vadd.f32 0.0, %v94
    %96 = vmatmul.f32.gmra.mxu0 %v54
    %v97 = vpop.f32.mrf.mxu0
    %v98 = vadd.f32 0.0, %v97
    %99 = vmatmul.f32.gmra.mxu0 %v57
    %v100 = vpop.f32.mrf.mxu0
    %v101 = vadd.f32 0.0, %v100
    %102 = vdwg.mxu0
    %v103 = vld [vmem:[%s1 + $0x110] sm:$0xff]
    %v104 = vld [vmem:[%s1 + $0x118] sm:$0xff]
    %v105 = vld [vmem:[%s1 + $0x120] sm:$0xff]
    %v106 = vld [vmem:[%s1 + $0x128] sm:$0xff]
    %v107 = vld [vmem:[%s1 + $0x130] sm:$0xff]
    %v108 = vld [vmem:[%s1 + $0x138] sm:$0xff]
    %v109 = vld [vmem:[%s1 + $0x140] sm:$0xff]
    %v110 = vld [vmem:[%s1 + $0x148] sm:$0xff]
    %v111 = vmul.f32 %v80, %v103
    %v112 = vmul.f32 %v83, %v104
    %v113 = vmul.f32 %v86, %v105
    %v114 = vmul.f32 %v89, %v106
    %v115 = vmul.f32 %v92, %v107
    %v116 = vmul.f32 %v95, %v108
    %v117 = vmul.f32 %v98, %v109
    %v118 = vmul.f32 %v101, %v110
    %vm119 = vcmask 523264
    %v121 = vsel %vm119, %v77, 0
    %v124 = vsel %vm119, %v111, 0
    %v127 = vsel %vm119, %v112, 0
    %v130 = vsel %vm119, %v113, 0
    %v133 = vsel %vm119, %v114, 0
    %v136 = vsel %vm119, %v115, 0
    %v139 = vsel %vm119, %v116, 0
    %v142 = vsel %vm119, %v117, 0
    %v145 = vsel %vm119, %v118, 0
    %147 = vmatpush.xpose.msra.mxu0 0.0
    %148 = vmatpush.xpose.msra.mxu0 0.0
    %149 = vmatpush.xpose.msra.mxu0 0.0
    %150 = vmatpush.xpose.msra.mxu0 0.0
    %151 = vmatpush.xpose.msra.mxu0 0.0
    %152 = vmatpush.xpose.msra.mxu0 0.0
    %153 = vmatpush.xpose.msra.mxu0 0.0
    %154 = vmatpush.xpose.msra.mxu0 0.0
    %155 = vmatpush.xpose.msra.mxu0 %v145
    %156 = vmatpush.xpose.msra.mxu0 %v142
    %157 = vmatpush.xpose.msra.mxu0 %v139
    %158 = vmatpush.xpose.msra.mxu0 %v136
    %159 = vmatpush.xpose.msra.mxu0 %v133
    %160 = vmatpush.xpose.msra.mxu0 %v130
    %161 = vmatpush.xpose.msra.mxu0 %v127
    %162 = vmatpush.xpose.msra.mxu0 %v124
    %163 = vmatmul.f32.gmra.mxu0 %v121
    %v164 = vpop.f32.mrf.mxu0
    %v165 = vadd.f32 %v21, %v164
    %166 = vdwg.mxu0
    %v167 = vsel %vm119, %v165, -inf
    %168 = vmax.xlane.f32.xlu0 %v167
    %v169 = vpop.xlane.xlu0 %168
    %v170 = vsub.f32 %v165, %v169
    %v171 = vmul.f32 %v170, 1.442695
    %v172 = vpow.pop %v171
    %v173 = vld [vmem:[%s1 + $0x150] sm:$0xff]
    %v174 = vld [vmem:[%s1 + $0x158] sm:$0xff]
    %v175 = vld [vmem:[%s1 + $0x160] sm:$0xff]
    %v176 = vld [vmem:[%s1 + $0x168] sm:$0xff]
    %v177 = vld [vmem:[%s1 + $0x170] sm:$0xff]
    %v178 = vld [vmem:[%s1 + $0x178] sm:$0xff]
    %v179 = vld [vmem:[%s1 + $0x180] sm:$0xff]
    %v180 = vld [vmem:[%s1 + $0x188] sm:$0xff]
    %v182 = vsel %vm119, %v172, 0
    %184 = vmatpush.msra.mxu0 0.0
    %185 = vmatpush.msra.mxu0 0.0
    %186 = vmatpush.msra.mxu0 0.0
    %187 = vmatpush.msra.mxu0 0.0
    %188 = vmatpush.msra.mxu0 0.0
    %189 = vmatpush.msra.mxu0 0.0
    %190 = vmatpush.msra.mxu0 0.0
    %191 = vmatpush.msra.mxu0 0.0
    %192 = vmatpush.msra.mxu0 %v180
    %193 = vmatpush.msra.mxu0 %v179
    %194 = vmatpush.msra.mxu0 %v178
    %195 = vmatpush.msra.mxu0 %v177
    %196 = vmatpush.msra.mxu0 %v176
    %197 = vmatpush.msra.mxu0 %v175
    %198 = vmatpush.msra.mxu0 %v174
    %199 = vmatpush.msra.mxu0 %v173
    %200 = vmatmul.f32.gmra.mxu0 %v182
    %v201 = vpop.f32.mrf.mxu0
    %v202 = vadd.f32 0.0, %v201
    %203 = vdwg.mxu0
    %204 = vmatpush.msra.mxu0 0.0
    %205 = vmatpush.msra.mxu0 0.0
    %206 = vmatpush.msra.mxu0 0.0
    %207 = vmatpush.msra.mxu0 0.0
    %208 = vmatpush.msra.mxu0 0.0
    %209 = vmatpush.msra.mxu0 0.0
    %210 = vmatpush.msra.mxu0 0.0
    %211 = vmatpush.msra.mxu0 0.0
    %212 = vmatpush.msra.mxu0 %v118
    %213 = vmatpush.msra.mxu0 %v117
    %214 = vmatpush.msra.mxu0 %v116
    %215 = vmatpush.msra.mxu0 %v115
    %216 = vmatpush.msra.mxu0 %v114
    %217 = vmatpush.msra.mxu0 %v113
    %218 = vmatpush.msra.mxu0 %v112
    %219 = vmatpush.msra.mxu0 %v111
    %220 = vmatmul.f32.gmra.mxu0 %v182
    %v221 = vpop.f32.mrf.mxu0
    %v222 = vadd.f32 0.0, %v221
    %223 = vdwg.mxu0
    %v224 = vrcp.pop %v202
    %v225 = vmul.f32 %v222, %v224
    %v226 = vld [vmem:[%s1 + $0x48] sm:$0xff]
    %v227 = vld [vmem:[%s1 + $0x50] sm:$0xff]
    %v228 = vld [vmem:[%s1 + $0x58] sm:$0xff]
    %v229 = vld [vmem:[%s1 + $0x60] sm:$0xff]
    %v230 = vld [vmem:[%s1 + $0x108] sm:$0x1]
    %v231 = vperm.slane %v230, 0
    %vm232 = vcmask 261120
    %v234 = vsel %vm232, %v225, 0
    %236 = vmatpush.msra.mxu0 0.0
    %237 = vmatpush.msra.mxu0 0.0
    %238 = vmatpush.msra.mxu0 0.0
    %239 = vmatpush.msra.mxu0 0.0
    %240 = vmatpush.msra.mxu0 0.0
    %241 = vmatpush.msra.mxu0 0.0
    %242 = vmatpush.msra.mxu0 0.0
    %243 = vmatpush.msra.mxu0 0.0
    %244 = vmatpush.msra.mxu0 0.0
    %245 = vmatpush.msra.mxu0 0.0
    %246 = vmatpush.msra.mxu0 0.0
    %247 = vmatpush.msra.mxu0 0.0
    %248 = vmatpush.msra.mxu0 %v229
    %249 = vmatpush.msra.mxu0 %v228
    %250 = vmatpush.msra.mxu0 %v227
    %251 = vmatpush.msra.mxu0 %v226
    %252 = vmatmul.f32.gmra.mxu0 %v234
    %v253 = vpop.f32.mrf.mxu0
    %v254 = vadd.f32 %v231, %v253
    %255 = vdwg.mxu0
    %v256 = vadd.f32 %v12, %v254
    %v257 = vld [vmem:[%s1 + $0x10b] sm:$0x1]
    %v258 = vld [vmem:[%s1 + $0x10c] sm:$0x1]
    %v259 = vsel %vm232, %v256, 0.0
    %260 = vadd.xlane.f32.xlu0 %v259
    %v261 = vpop.xlane.xlu0 %260
    %v262 = vrcp.pop 32.0
    %v263 = vmul.f32 32.0, %v262
    %v264 = vsub.f32 1.0, %v263
    %v265 = vmul.f32 %v262, %v264
    %v266 = vadd.f32 %v262, %v265
    %vm267 = vweird.f32 %v262
    %v268 = vsel %vm267, %v262, %v266
    %v269 = vmul.f32 %v261, %v268
    %v270 = vsub.f32 %v256, %v269
    %v271 = vmul.f32 %v270, %v270
    %v272 = vsel %vm232, %v271, 0.0
    %273 = vadd.xlane.f32.xlu0 %v272
    %v274 = vpop.xlane.xlu0 %273
    %v275 = vmul.f32 %v274, %v268
    %v276 = vadd.f32 %v275, 1e-05
    %v277 = vrsqrt.pop %v276
    %v278 = vmul.f32 %v277, %v276
    %v279 = vmul.f32 %v278, %v277
    %v280 = vmul.f32 0.5, %v279
    %v281 = vsub.f32 1.5, %v280
    %v282 = vmul.f32 %v277, %v281
    %vm283 = vweird.f32 %v276
    %vm284 = vweird.f32 %v277
    %vm285 = vmor %vm283, %vm284
    %v286 = vsel %vm285, %v277, %v282
    %v287 = vmul.f32 %v270, %v286
    %v288 = vperm.slane %v257, 0
    %v289 = vmul.f32 %v287, %v288
    %v290 = vperm.slane %v258, 0
    %v291 = vadd.f32 %v289, %v290
    %v292 = vld [vmem:[%s1 + $0x68] sm:$0xff]
    %v293 = vld [vmem:[%s1 + $0x70] sm:$0xff]
    %v294 = vld [vmem:[%s1 + $0x78] sm:$0xff]
    %v295 = vld [vmem:[%s1 + $0x80] sm:$0xff]
    %v296 = vld [vmem:[%s1 + $0x109] sm:$0x1]
    %v297 = vperm.slane %v296, 0
    %v299 = vsel %vm232, %v291, 0
    %301 = vmatpush.msra.mxu0 0.0
    %302 = vmatpush.msra.mxu0 0.0
    %303 = vmatpush.msra.mxu0 0.0
    %304 = vmatpush.msra.mxu0 0.0
    %305 = vmatpush.msra.mxu0 0.0
    %306 = vmatpush.msra.mxu0 0.0
    %307 = vmatpush.msra.mxu0 0.0
    %308 = vmatpush.msra.mxu0 0.0
    %309 = vmatpush.msra.mxu0 0.0
    %310 = vmatpush.msra.mxu0 0.0
    %311 = vmatpush.msra.mxu0 0.0
    %312 = vmatpush.msra.mxu0 0.0
    %313 = vmatpush.msra.mxu0 %v295
    %314 = vmatpush.msra.mxu0 %v294
    %315 = vmatpush.msra.mxu0 %v293
    %316 = vmatpush.msra.mxu0 %v292
    %317 = vmatmul.f32.gmra.mxu0 %v299
    %v318 = vpop.f32.mrf.mxu0
    %v319 = vadd.f32 %v297, %v318
    %320 = vdwg.mxu0
    %v321 = vmax.f32 %v319, 0.0
    %v322 = vld [vmem:[%s1 + $0x88] sm:$0xff]
    %v323 = vld [vmem:[%s1 + $0x90] sm:$0xff]
    %v324 = vld [vmem:[%s1 + $0x98] sm:$0xff]
    %v325 = vld [vmem:[%s1 + $0xa0] sm:$0xff]
    %v326 = vld [vmem:[%s1 + $0xa8] sm:$0xff]
    %v327 = vld [vmem:[%s1 + $0xb0] sm:$0xff]
    %v328 = vld [vmem:[%s1 + $0xb8] sm:$0xff]
    %v329 = vld [vmem:[%s1 + $0xc0] sm:$0xff]
    %v330 = vld [vmem:[%s1 + $0xc8] sm:$0xff]
    %v331 = vld [vmem:[%s1 + $0xd0] sm:$0xff]
    %v332 = vld [vmem:[%s1 + $0xd8] sm:$0xff]
    %v333 = vld [vmem:[%s1 + $0xe0] sm:$0xff]
    %v334 = vld [vmem:[%s1 + $0xe8] sm:$0xff]
    %v335 = vld [vmem:[%s1 + $0xf0] sm:$0xff]
    %v336 = vld [vmem:[%s1 + $0xf8] sm:$0xff]
    %v337 = vld [vmem:[%s1 + $0x100] sm:$0xff]
    %v338 = vld [vmem:[%s1 + $0x10a] sm:$0x1]
    %v339 = vperm.slane %v338, 0
    %340 = vmatpush.msra.mxu0 %v337
    %341 = vmatpush.msra.mxu0 %v336
    %342 = vmatpush.msra.mxu0 %v335
    %343 = vmatpush.msra.mxu0 %v334
    %344 = vmatpush.msra.mxu0 %v333
    %345 = vmatpush.msra.mxu0 %v332
    %346 = vmatpush.msra.mxu0 %v331
    %347 = vmatpush.msra.mxu0 %v330
    %348 = vmatpush.msra.mxu0 %v329
    %349 = vmatpush.msra.mxu0 %v328
    %350 = vmatpush.msra.mxu0 %v327
    %351 = vmatpush.msra.mxu0 %v326
    %352 = vmatpush.msra.mxu0 %v325
    %353 = vmatpush.msra.mxu0 %v324
    %354 = vmatpush.msra.mxu0 %v323
    %355 = vmatpush.msra.mxu0 %v322
    %356 = vmatmul.f32.gmra.mxu0 %v321
    %v357 = vpop.f32.mrf.mxu0
    %v358 = vadd.f32 %v339, %v357
    %359 = vdwg.mxu0
    %v360 = vadd.f32 %v291, %v358
    %v361 = vld [vmem:[%s1 + $0x10d] sm:$0x1]
    %v362 = vld [vmem:[%s1 + $0x10e] sm:$0x1]
    %v363 = vsel %vm232, %v360, 0.0
    %364 = vadd.xlane.f32.xlu0 %v363
    %v365 = vpop.xlane.xlu0 %364
    %v366 = vmul.f32 %v365, %v268
    %v367 = vsub.f32 %v360, %v366
    %v368 = vmul.f32 %v367, %v367
    %v369 = vsel %vm232, %v368, 0.0
    %370 = vadd.xlane.f32.xlu0 %v369
    %v371 = vpop.xlane.xlu0 %370
    %v372 = vmul.f32 %v371, %v268
    %v373 = vadd.f32 %v372, 1e-05
    %v374 = vrsqrt.pop %v373
    %v375 = vmul.f32 %v374, %v373
    %v376 = vmul.f32 %v375, %v374
    %v377 = vmul.f32 0.5, %v376
    %v378 = vsub.f32 1.5, %v377
    %v379 = vmul.f32 %v374, %v378
    %vm380 = vweird.f32 %v373
    %vm381 = vweird.f32 %v374
    %vm382 = vmor %vm380, %vm381
    %v383 = vsel %vm382, %v374, %v379
    %v384 = vmul.f32 %v367, %v383
    %v385 = vperm.slane %v361, 0
    %v386 = vmul.f32 %v384, %v385
    %v387 = vperm.slane %v362, 0
    %v388 = vadd.f32 %v386, %v387
    %389 = vst.msk [vmem:[#allocation2] sm:$0xff] %vm232, %v388
    // Predicated region
    $region10: #{decoder_p_forward.1} parent=1 // pred_check
      _
    $region11: #{decoder_p_forward.1} parent=1 // pred_check_branch
      %391 = sbr.rel (0) target = $region13
    $region12: #{decoder_p_forward.1} parent=1 // pred_region
      %393 = vsyncadd [#allocation3], 0
      %s395 = sshll.u32 [#allocation2], 4
      %s396 = int_to_ptr.vmem [resolvable:$true] %s395
      %s397 = sshll.u32 %s2, 4
      %s398 = int_to_ptr.hbm [resolvable:$true] %s397
      %400 = dma.vmem_to_hbm [thread:$0]  %s396, 128, %s398, [#allocation3]
    $region13: #{decoder_p_forward.1} parent=1 // pred_fallthru
      _
    // Predicated region
    $region14: #{decoder_p_forward.1} parent=1 // pred_check
      _
    $region15: #{decoder_p_forward.1} parent=1 // pred_check_branch
      %402 = sbr.rel (0) target = $region17
    $region16: #{decoder_p_forward.1} parent=1 // pred_region
      %404 = dma.done [#allocation3], 128
    $region17: #{decoder_p_forward.1} parent=1 // pred_fallthru
      _
    %405 = vsyncpa [#allocation3], 1

</llo_original>
